<compile_context>
chip_gen: v6e
topology: v6e:2x2x1
jax: 0.10.0
libtpu: 0.0.40
codegen_flags: <defaults>
</compile_context>

<pallas_src>
import functools

import jax
import jax.numpy as jnp
from jax.experimental import pallas as pl
from jax.experimental.pallas import tpu as pltpu


def _round_up(n: int, m: int) -> int:
    return ((n + m - 1) // m) * m


def linear_residual_kernel(x_ref, wt_ref, o_ref, *, matmul_dtype):
    # x_ref:  (TM, D) activation tile
    # wt_ref: (D, D) weight (already W^T), VMEM-resident across the grid
    # o_ref:  (TM, D) output tile
    x = x_ref[...]
    y = jnp.dot(
        x.astype(matmul_dtype),
        wt_ref[...].astype(matmul_dtype),      # no-op when weight is prepared in matmul_dtype
        preferred_element_type=jnp.float32,
    )
    # Residual add in f32, single cast on the way out.
    o_ref[...] = (y + x.astype(jnp.float32)).astype(o_ref.dtype)


def prepare_weight(w, *, dtype=jnp.float32):
    """One-time weight prep (hoisted out of the forward pass).

    Takes the torch-style (D_out, D_in) weight and returns W^T in the matmul
    dtype (f32 for exact parity, bf16 for the half-traffic path).
    """
    d_out, d_in = w.shape
    assert d_out == d_in, "residual add requires a square Linear"
    return jnp.transpose(w).astype(dtype)


def _pick_tile_m(M: int, tm: int, sublane: int) -> int:
    """Choose the M tile size.

    * M <= tm: one full-extent tile (legal for any M, no boundary masking).
    * M  > tm: tile of `tm` rows (sublane multiple); cap so the grid has at
      least ~4 tiles so the "parallel" axis gives both v7x TensorCores work.
    """
    if M <= tm:
        return M
    tile = max((tm // sublane) * sublane, sublane)
    tile = min(tile, _round_up(pl.cdiv(M, 4), sublane))
    return max(tile, sublane)


def linear_with_residual(x, wt, *, tm: int = 4096, matmul_dtype=None):
    """x: (B, S, D) activations; wt: (D, D) from prepare_weight (= W^T)."""
    B, S, D = x.shape
    assert wt.shape == (D, D)
    if matmul_dtype is None:
        matmul_dtype = wt.dtype

    M = B * S
    x2 = x.reshape(M, D)

    # bf16 packs two rows per sublane -> keep the tile a multiple of 16 there.
    bf16_io = (jnp.dtype(x.dtype) == jnp.dtype(jnp.bfloat16)
               or jnp.dtype(matmul_dtype) == jnp.dtype(jnp.bfloat16))
    sublane = 16 if bf16_io else 8

    TM = _pick_tile_m(M, tm, sublane)
    grid = (pl.cdiv(M, TM),)

    kernel = functools.partial(linear_residual_kernel,
                               matmul_dtype=matmul_dtype)

    x_bytes = jnp.dtype(x.dtype).itemsize
    w_bytes = jnp.dtype(wt.dtype).itemsize

    out = pl.pallas_call(
        kernel,
        out_shape=jax.ShapeDtypeStruct((M, D), x.dtype),
        grid=grid,
        in_specs=[
            # Activation tile marches along M (double-buffered by Pallas);
            # boundary tile is clipped automatically.
            pl.BlockSpec((TM, D), lambda i: (i, 0)),
            # Weight: constant index_map -> stays resident in VMEM.
            pl.BlockSpec((D, D), lambda i: (0, 0)),
        ],
        out_specs=pl.BlockSpec((TM, D), lambda i: (i, 0)),
        compiler_params=pltpu.CompilerParams(
            # M tiles are independent -> shard across both TCs on v7x.
            dimension_semantics=("parallel",),
        ),
        cost_estimate=pl.CostEstimate(
            flops=2 * M * D * D,
            transcendentals=0,
            bytes_accessed=2 * M * D * x_bytes + D * D * w_bytes,
        ),
    )(x2, wt)

    return out.reshape(B, S, D)


if __name__ == "__main__":
    B, S, D = 2, 3, 100  # small, runnable shapes consistent with the module

    key = jax.random.PRNGKey(0)
    kx, kw = jax.random.split(key)

    x = jax.random.normal(kx, (B, S, D), dtype=jnp.float32)
    # torch.nn.Linear default init: U(-1/sqrt(fan_in), 1/sqrt(fan_in))
    bound = 1.0 / jnp.sqrt(jnp.float32(D))
    w = jax.random.uniform(kw, (D, D), dtype=jnp.float32,
                           minval=-bound, maxval=bound)

    # Plain-JAX reference of the torch forward: x @ W.T + x
    ref = jnp.einsum("bsd,od->bso", x, w) + x

    # --- f32 path (default; exact parity with torch) ---
    wt = prepare_weight(w)                       # one-time transpose, hoisted
    out = jax.block_until_ready(linear_with_residual(x, wt))
    assert out.shape == (B, S, D)
    assert jnp.allclose(out, ref, atol=1e-4, rtol=1e-4)

    # --- bf16 I/O path (halves HBM traffic; f32 accumulate + residual) ---
    wt_bf16 = prepare_weight(w, dtype=jnp.bfloat16)
    out_bf16 = jax.block_until_ready(
        linear_with_residual(x.astype(jnp.bfloat16), wt_bf16))
    assert out_bf16.shape == (B, S, D)
    assert jnp.allclose(out_bf16.astype(jnp.float32), ref,
                        atol=5e-2, rtol=5e-2)

    print("KERNEL_OK")
</pallas_src>

<mosaic_0001>
module attributes {stable_mosaic.version = 11 : i64} {
  func.func @linear_residual_kernel(%arg0: i32, %arg1: memref<6x100xf32, #tpu.memory_space<vmem>>, %arg2: memref<100x100xf32, #tpu.memory_space<vmem>>, %arg3: memref<6x100xf32, #tpu.memory_space<vmem>>) attributes {dimension_semantics = [#tpu.dimension_semantics<parallel>], iteration_bounds = array<i64: 1>, scalar_prefetch = 0 : i64, scratch_operands = 0 : i64, tpu.core_type = #tpu.core_type<tc>, window_params = [{transform_indices = @transform_0, window_bounds = array<i64: 6, 100>}, {pipeline_mode = #tpu.pipeline_mode<synchronous>, transform_indices = @transform_1, window_bounds = array<i64: 100, 100>}, {transform_indices = @transform_2, window_bounds = array<i64: 6, 100>}]} {
    %c0 = arith.constant 0 : index
    %c0_0 = arith.constant 0 : index
    %0 = vector.load %arg1[%c0, %c0_0] : memref<6x100xf32, #tpu.memory_space<vmem>>, vector<6x100xf32>
    %c0_1 = arith.constant 0 : index
    %c0_2 = arith.constant 0 : index
    %1 = vector.load %arg2[%c0_1, %c0_2] : memref<100x100xf32, #tpu.memory_space<vmem>>, vector<100x100xf32>
    %cst = arith.constant dense<0.000000e+00> : vector<6x100xf32>
    %2 = tpu.matmul %0, %1, %cst {dimension_numbers = #tpu.dot_dimension_numbers<[1], [0], [0], [1], [0, 0, 1, 1], [], []>} : vector<6x100xf32>, vector<100x100xf32>, vector<6x100xf32> -> vector<6x100xf32>
    %3 = arith.addf %2, %0 : vector<6x100xf32>
    %c0_3 = arith.constant 0 : index
    %c0_4 = arith.constant 0 : index
    %4 = vector.load %arg3[%c0_3, %c0_4] : memref<6x100xf32, #tpu.memory_space<vmem>>, vector<6x100xf32>
    tpu.vector_store %arg3[%c0_3, %c0_4], %3 {strides = array<i32>} : memref<6x100xf32, #tpu.memory_space<vmem>>, vector<6x100xf32>,
    return
  }
  func.func @transform_0(%arg0: i32) -> (i32, i32) {
    %c0_i32 = arith.constant 0 : i32
    %c0_i32_0 = arith.constant 0 : i32
    return %arg0, %c0_i32 : i32, i32
  }
  func.func @transform_1(%arg0: i32) -> (i32, i32) {
    %c0_i32 = arith.constant 0 : i32
    %c0_i32_0 = arith.constant 0 : i32
    %c0_i32_1 = arith.constant 0 : i32
    return %c0_i32, %c0_i32_0 : i32, i32
  }
  func.func @transform_2(%arg0: i32) -> (i32, i32) {
    %c0_i32 = arith.constant 0 : i32
    %c0_i32_0 = arith.constant 0 : i32
    return %arg0, %c0_i32 : i32, i32
  }
}

</mosaic_0001>

<llo_original>
// kernel: tpu_custom_call.1
$region0: #{tpu_custom_call.1}
  #allocation0 [shape = 'u32[]', space=smem, size = 0x4, offset = 0x4, fixed_abs, tag = 'smem constant byte address 0x4 - core index']
  #allocation1 [shape = 'u32[144,128]{1,0:T(1,128)}', space=vmem, size = 0x12000, scoped, tag = 'internal scratch']
  %s0 = inlined_call_operand.hbm [shape: f32[6,100], index: 0, kind: input, shape index: {}]
  %s1 = inlined_call_operand.hbm [shape: f32[100,100], index: 1, kind: input, shape index: {}]
  %s2 = inlined_call_operand.hbm [shape: f32[6,100], index: 2, kind: output, shape index: {}]
  %s3 = sld [smem:[#allocation0]]
  $region26: #{tpu_custom_call.1} parent=0
    _
  %s5 = ssub.s32 1, %s3
  %s6 = scalar_select 0, %s5, %s3
  $region1: #{tpu_custom_call.1} parent=0
    #allocation2 [shape = 'u8[4096]{0}', space=vmem, size = 0x1000, scoped, tag = 'input window, operand 0, single buffered']
    #allocation3 [shape = 's32[1]{0}', space=sflag, size = 0x4, scoped, tag = 'scoped memory for tpu_custom_call.1']
    #allocation4 [shape = 's32[1]{0}', space=sflag, size = 0x4, scoped, tag = 'scoped memory for tpu_custom_call.1']
    #allocation5 [shape = 'u8[53248]{0}', space=vmem, size = 0xd000, scoped, tag = 'input window, operand 1, single buffered']
    #allocation6 [shape = 's32[1]{0}', space=sflag, size = 0x4, scoped, tag = 'scoped memory for tpu_custom_call.1']
    #allocation7 [shape = 'u8[4096]{0}', space=vmem, size = 0x1000, scoped, tag = 'output window, operand 0, single buffered']
    %7 = vsyncpa [#allocation3], 0
    %8 = vsyncpa [#allocation6], 0
    %9 = vsyncpa [#allocation4], 0
    // Predicated region
    $region2: #{tpu_custom_call.1} parent=1 // pred_check
      _
    $region3: #{tpu_custom_call.1} parent=1 // pred_check_branch
      %11 = sbr.rel (0) target = $region5
    $region4: #{tpu_custom_call.1} parent=1 // pred_region
      %s13 = ssub.s32 128, 128
      %14 = vsyncadd [#allocation3], %s13
      %s16 = sshll.u32 [#allocation2], 4
      %s17 = int_to_ptr.vmem [resolvable:$true] %s16
      %19 = dma.hbm_to_vmem [thread:$0]  %s0, 128, %s17, [#allocation3]
    $region5: #{tpu_custom_call.1} parent=1 // pred_fallthru
      _
    // Predicated region
    $region6: #{tpu_custom_call.1} parent=1 // pred_check
      _
    $region7: #{tpu_custom_call.1} parent=1 // pred_check_branch
      %21 = sbr.rel (0) target = $region9
    $region8: #{tpu_custom_call.1} parent=1 // pred_region
      %s23 = ssub.s32 1664, 1664
      %24 = vsyncadd [#allocation6], %s23
      %s25 = sshll.u32 [#allocation5], 4
      %s26 = int_to_ptr.vmem [resolvable:$true] %s25
      %31 = dma.hbm_to_vmem [thread:$0]  %s1, 1664, %s26, [#allocation6], 128, 128, 8
    $region9: #{tpu_custom_call.1} parent=1 // pred_fallthru
      _
    // Predicated region
    $region10: #{tpu_custom_call.1} parent=1 // pred_check
      _
    $region11: #{tpu_custom_call.1} parent=1 // pred_check_branch
      %33 = sbr.rel (0) target = $region13
    $region12: #{tpu_custom_call.1} parent=1 // pred_region
      %34 = dma.done [#allocation3], 128
    $region13: #{tpu_custom_call.1} parent=1 // pred_fallthru
      _
    // Predicated region
    $region14: #{tpu_custom_call.1} parent=1 // pred_check
      _
    $region15: #{tpu_custom_call.1} parent=1 // pred_check_branch
      %36 = sbr.rel (0) target = $region17
    $region16: #{tpu_custom_call.1} parent=1 // pred_region
      %37 = dma.done [#allocation6], 1664
    $region17: #{tpu_custom_call.1} parent=1 // pred_fallthru
      _
    %v38 = vld [vmem:[#allocation2] sm:$0x3f]
    %v39 = vld [vmem:[#allocation5] sm:$0xff]
    %v40 = vld [vmem:[#allocation5 + $0x8] sm:$0xff]
    %v41 = vld [vmem:[#allocation5 + $0x10] sm:$0xff]
    %v42 = vld [vmem:[#allocation5 + $0x18] sm:$0xff]
    %v43 = vld [vmem:[#allocation5 + $0x20] sm:$0xff]
    %v44 = vld [vmem:[#allocation5 + $0x28] sm:$0xff]
    %v45 = vld [vmem:[#allocation5 + $0x30] sm:$0xff]
    %v46 = vld [vmem:[#allocation5 + $0x38] sm:$0xff]
    %v47 = vld [vmem:[#allocation5 + $0x40] sm:$0xff]
    %v48 = vld [vmem:[#allocation5 + $0x48] sm:$0xff]
    %v49 = vld [vmem:[#allocation5 + $0x50] sm:$0xff]
    %v50 = vld [vmem:[#allocation5 + $0x58] sm:$0xff]
    %v51 = vld [vmem:[#allocation5 + $0x60] sm:$0xf]
    %vm52 = vcmask 818176
    %v54 = vsel %vm52, %v38, 0
    %vm56 = vcmask 1043456
    %v58 = vsel %vm56, %v51, 0
    %60 = vmatprep.subr.mxu0 0.0
    %61 = vmatpush1.msra.mxu0 0.0
    %62 = vmatprep.subr.mxu0 0.0
    %63 = vmatpush1.msra.mxu0 0.0
    %64 = vmatprep.subr.mxu0 0.0
    %65 = vmatpush1.msra.mxu0 0.0
    %66 = vmatprep.subr.mxu0 0.0
    %67 = vmatpush1.msra.mxu0 %v58
    %68 = vmatprep.subr.mxu0 0.0
    %69 = vmatpush1.msra.mxu0 %v50
    %70 = vmatprep.subr.mxu0 0.0
    %71 = vmatpush1.msra.mxu0 %v49
    %72 = vmatprep.subr.mxu0 0.0
    %73 = vmatpush1.msra.mxu0 %v48
    %74 = vmatprep.subr.mxu0 0.0
    %75 = vmatpush1.msra.mxu0 %v47
    %76 = vmatprep.subr.mxu0 0.0
    %77 = vmatpush1.msra.mxu0 %v46
    %78 = vmatprep.subr.mxu0 0.0
    %79 = vmatpush1.msra.mxu0 %v45
    %80 = vmatprep.subr.mxu0 0.0
    %81 = vmatpush1.msra.mxu0 %v44
    %82 = vmatprep.subr.mxu0 0.0
    %83 = vmatpush1.msra.mxu0 %v43
    %84 = vmatprep.subr.mxu0 0.0
    %85 = vmatpush1.msra.mxu0 %v42
    %86 = vmatprep.subr.mxu0 0.0
    %87 = vmatpush1.msra.mxu0 %v41
    %88 = vmatprep.subr.mxu0 0.0
    %89 = vmatpush1.msra.mxu0 %v40
    %90 = vmatprep.subr.mxu0 0.0
    %91 = vmatpush1.msra.mxu0 %v39
    %92 = vmatprep.subr.mxu0 0.0
    %93 = vmatpush2.msra.mxu0 0.0
    %94 = vmatprep.subr.mxu0 0.0
    %95 = vmatpush2.msra.mxu0 0.0
    %96 = vmatprep.subr.mxu0 0.0
    %97 = vmatpush2.msra.mxu0 0.0
    %98 = vmatprep.subr.mxu0 0.0
    %99 = vmatpush2.msra.mxu0 0.0
    %100 = vmatprep.subr.mxu0 0.0
    %101 = vmatpush2.msra.mxu0 0.0
    %102 = vmatprep.subr.mxu0 0.0
    %103 = vmatpush2.msra.mxu0 0.0
    %104 = vmatprep.subr.mxu0 0.0
    %105 = vmatpush2.msra.mxu0 0.0
    %106 = vmatprep.subr.mxu0 0.0
    %107 = vmatpush2.msra.mxu0 0.0
    %108 = vmatprep.subr.mxu0 0.0
    %109 = vmatpush2.msra.mxu0 0.0
    %110 = vmatprep.subr.mxu0 0.0
    %111 = vmatpush2.msra.mxu0 0.0
    %112 = vmatprep.subr.mxu0 0.0
    %113 = vmatpush2.msra.mxu0 0.0
    %114 = vmatprep.subr.mxu0 0.0
    %115 = vmatpush2.msra.mxu0 0.0
    %116 = vmatprep.subr.mxu0 0.0
    %117 = vmatpush2.msra.mxu0 0.0
    %118 = vmatprep.subr.mxu0 0.0
    %119 = vmatpush2.msra.mxu0 0.0
    %120 = vmatprep.subr.mxu0 0.0
    %121 = vmatpush2.msra.mxu0 0.0
    %122 = vmatprep.subr.mxu0 0.0
    %123 = vmatpush2.msra.mxu0 0.0
    %124 = vmatprep.mubr.f32.mxu0 0.0
    %125 = vmatmul.mubr.f32.gmra.mxu0 %v54
    %v126 = vpop.f32.mrf.mxu0
    %v127 = vadd.f32 %v38, %v126
    %v128 = vpop.f32.mrf.mxu0
    %129 = vdwg.mxu0
    %vm130 = vcmask 816128
    %131 = vst.msk [vmem:[#allocation7] sm:$0x3f] %vm130, %v127
    // Predicated region
    $region18: #{tpu_custom_call.1} parent=1 // pred_check
      _
    $region19: #{tpu_custom_call.1} parent=1 // pred_check_branch
      %133 = sbr.rel (0) target = $region21
    $region20: #{tpu_custom_call.1} parent=1 // pred_region
      %s135 = ssub.s32 128, 128
      %136 = vsyncadd [#allocation4], %s135
      %s138 = sshll.u32 [#allocation7], 4
      %s139 = int_to_ptr.vmem [resolvable:$true] %s138
      %141 = dma.vmem_to_hbm [thread:$0]  %s139, 128, %s2, [#allocation4]
    $region21: #{tpu_custom_call.1} parent=1 // pred_fallthru
      _
    // Predicated region
    $region22: #{tpu_custom_call.1} parent=1 // pred_check
      _
    $region23: #{tpu_custom_call.1} parent=1 // pred_check_branch
      %143 = sbr.rel (0) target = $region25
    $region24: #{tpu_custom_call.1} parent=1 // pred_region
      %144 = dma.done [#allocation4], 128
    $region25: #{tpu_custom_call.1} parent=1 // pred_fallthru
      _
    %145 = vsyncpa [#allocation3], 1
    %146 = vsyncpa [#allocation6], 1
    %147 = vsyncpa [#allocation4], 1

</llo_original>
